<compile_context>
chip_gen: v7x
topology: tpu7x:2x2x1
jax: 0.10.0
libtpu: 0.0.40
codegen_flags: <defaults>
</compile_context>

<pallas_src>
import jax
import jax.numpy as jnp
from jax.experimental import pallas as pl
from jax.experimental.pallas import tpu as pltpu


def _make_loss_kernel(total_rows: int, block_rows: int, num_blocks: int,
                      mask_is_float: bool):
    """Build a kernel closed over static shape facts (no scalar prefetch needed)."""
    partial_last = (total_rows % block_rows) != 0
    last_valid_rows = total_rows - (num_blocks - 1) * block_rows  # static int

    def _block_partial(aw_ref, mk_ref, row_bound):
        aw = aw_ref[...].astype(jnp.float32)
        if mask_is_float:
            # Exact PyTorch math for float masks: aw * (1 - mask).
            contrib = aw * (1.0 - mk_ref[...].astype(jnp.float32))
        else:
            # Binary int/bool mask: select is cheaper (compare + select only).
            contrib = jnp.where(mk_ref[...] == 0, aw, 0.0)
        if row_bound is not None:
            # Drop rows from the Pallas-padded region of the edge block.
            rows = jax.lax.broadcasted_iota(jnp.int32, contrib.shape, 0)
            contrib = jnp.where(rows < row_bound, contrib, 0.0)
        # Reduce over the row axis only (mostly VPU adds, one tiny intra-tile
        # reduce per step); lanes stay dense so the output store is unmasked.
        return jnp.sum(contrib, axis=0, keepdims=True)[None]  # (1, 1, C)

    def kernel(aw_ref, mk_ref, out_ref):
        if not partial_last:
            out_ref[...] = _block_partial(aw_ref, mk_ref, None)
        else:
            i = pl.program_id(0)
            last = pl.num_programs(0) - 1

            @pl.when(i != last)
            def _full():
                out_ref[...] = _block_partial(aw_ref, mk_ref, None)

            @pl.when(i == last)
            def _edge():
                out_ref[...] = _block_partial(aw_ref, mk_ref, last_valid_rows)

    return kernel


def script_aware_loss(attention_weights: jax.Array,
                      script_mask: jax.Array,
                      *,
                      target_block_elems: int = 512 * 1024,
                      block_rows: int | None = None) -> jax.Array:
    """Pallas implementation of ScriptAwareLoss.forward.

    attention_weights: [B, H, Sq, Sk], any float dtype (kept native in HBM).
    script_mask:       [B, H, Sq, Sk]; int8/bool recommended (less HBM traffic).
    returns: scalar float32 loss = sum(aw * (1 - mask)) / (B * H)
    """
    if attention_weights.ndim != 4:
        raise ValueError("expected [B, H, Sq, Sk] attention weights")
    # TODO(synk): PyTorch-style broadcast masks (e.g. [B,1,S,S]) would need an
    # index_map-level broadcast; same-shape masks only for now.
    if script_mask.shape != attention_weights.shape:
        raise ValueError("script_mask must have the same shape as attention_weights")

    B, H, Sq, Sk = attention_weights.shape
    denom = jnp.float32(B * H)
    R = B * H * Sq        # rows of the 2-D view
    C = Sk                # lane (fast) axis of the 2-D view

    def _fallback():
        # Tiny / odd shapes (Sk not lane-aligned, or huge Sk) -> plain XLA reduce.
        inv = attention_weights.astype(jnp.float32) * (
            1.0 - script_mask.astype(jnp.float32))
        return jnp.sum(inv) / denom

    if C % 128 != 0 or R < 32:
        return _fallback()

    # Row-block size: multiple of 32 (native tiling for f32/bf16/int8), sized so
    # the f32 weight block is ~2 MiB (>=85% mem-bound roofline, fits v5e VMEM).
    if block_rows is None:
        br = (target_block_elems // C) // 32 * 32
    else:
        br = block_rows // 32 * 32
    br = max(32, min(br, (R // 32) * 32))
    if br * C * 4 > 8 * 1024 * 1024:   # pathological Sk -> block too big for VMEM
        return _fallback()

    num_blocks = pl.cdiv(R, br)

    # Collapsing leading dims is layout-preserving (free) for every dtype.
    aw2 = attention_weights.reshape(R, C)
    mk2 = script_mask.reshape(R, C)

    mask_is_float = jnp.issubdtype(script_mask.dtype, jnp.floating)
    kernel = _make_loss_kernel(R, br, num_blocks, mask_is_float)

    partials = pl.pallas_call(
        kernel,
        out_shape=jax.ShapeDtypeStruct((num_blocks, 1, C), jnp.float32),
        grid=(num_blocks,),
        in_specs=[
            pl.BlockSpec((br, C), lambda i: (i, 0)),
            pl.BlockSpec((br, C), lambda i: (i, 0)),
        ],
        out_specs=pl.BlockSpec((1, 1, C), lambda i: (i, 0, 0)),
        compiler_params=pltpu.CompilerParams(
            # Independent per-block partials: shardable across both v7x TCs;
            # a plain sequential loop on single-TC v5e/v6e.
            dimension_semantics=("parallel",),
        ),
    )(aw2, mk2)

    # Single tiny cross-block/cross-lane reduction + normalization in plain JAX.
    # Divisor is the explicit constant B*H, independent of tiling.
    return jnp.sum(partials) / denom


def _reference(aw, mk):
    B, H = aw.shape[0], aw.shape[1]
    inv = aw.astype(jnp.float32) * (1.0 - mk.astype(jnp.float32))
    return jnp.sum(inv) / jnp.float32(B * H)


if __name__ == "__main__":
    key = jax.random.PRNGKey(0)
    k1, k2, k3, k4 = jax.random.split(key, 4)

    # Case 1: kernel path, float 0/1 mask (exact PyTorch arithmetic), one block.
    B, H, S = 2, 4, 128
    logits = jax.random.normal(k1, (B, H, S, S), dtype=jnp.float32)
    aw = jax.nn.softmax(logits, axis=-1)
    mask_f = (jax.random.uniform(k2, (B, H, S, S)) > 0.5).astype(jnp.float32)
    out1 = jax.block_until_ready(script_aware_loss(aw, mask_f))
    ref1 = _reference(aw, mask_f)
    assert jnp.allclose(out1, ref1, rtol=1e-4, atol=1e-4), (out1, ref1)

    # Case 2: kernel path, int8 mask, forced small row blocks so the last block
    # is partial (exercises the in-kernel iota row masking of padded rows).
    mask_i8 = (jax.random.uniform(k3, (B, H, S, S)) > 0.5).astype(jnp.int8)
    out2 = jax.block_until_ready(script_aware_loss(aw, mask_i8, block_rows=96))
    ref2 = _reference(aw, mask_i8)
    assert jnp.allclose(out2, ref2, rtol=1e-4, atol=1e-4), (out2, ref2)

    # Case 3: odd last dim (Sk % 128 != 0) -> plain-JAX fallback path.
    S3 = 48
    aw3 = jax.nn.softmax(
        jax.random.normal(k4, (B, H, S3, S3), dtype=jnp.float32), axis=-1)
    mask3 = (aw3 > 0.02).astype(jnp.int8)
    out3 = jax.block_until_ready(script_aware_loss(aw3, mask3))
    ref3 = _reference(aw3, mask3)
    assert jnp.allclose(out3, ref3, rtol=1e-4, atol=1e-4), (out3, ref3)

    print("KERNEL_OK")
</pallas_src>

<mosaic_0001>
module attributes {stable_mosaic.version = 11 : i64} {
  func.func @kernel(%arg0: i32, %arg1: memref<1024x128xf32, #tpu.memory_space<vmem>>, %arg2: memref<1024x128xf32, #tpu.memory_space<vmem>>, %arg3: memref<1x1x128xf32, #tpu.memory_space<vmem>>) attributes {dimension_semantics = [#tpu.dimension_semantics<parallel>], iteration_bounds = array<i64: 1>, scalar_prefetch = 0 : i64, scratch_operands = 0 : i64, tpu.core_type = #tpu.core_type<tc>, window_params = [{transform_indices = @transform_0, window_bounds = array<i64: 1024, 128>}, {transform_indices = @transform_1, window_bounds = array<i64: 1024, 128>}, {transform_indices = @transform_2, window_bounds = array<i64: 1, 1, 128>}]} {
    %c0 = arith.constant 0 : index
    %c0_0 = arith.constant 0 : index
    %0 = vector.load %arg1[%c0, %c0_0] : memref<1024x128xf32, #tpu.memory_space<vmem>>, vector<1024x128xf32>
    %c0_1 = arith.constant 0 : index
    %c0_2 = arith.constant 0 : index
    %1 = vector.load %arg2[%c0_1, %c0_2] : memref<1024x128xf32, #tpu.memory_space<vmem>>, vector<1024x128xf32>
    %cst = arith.constant 1.000000e+00 : f32
    %2 = vector.broadcast %cst : f32 to vector<1024x128xf32>
    %3 = arith.subf %2, %1 : vector<1024x128xf32>
    %4 = arith.mulf %0, %3 : vector<1024x128xf32>
    %cst_3 = arith.constant dense<0.000000e+00> : vector<128xf32>
    %5 = vector.multi_reduction <add>, %4, %cst_3 [0] : vector<1024x128xf32> to vector<128xf32>
    %6 = vector.shape_cast %5 : vector<128xf32> to vector<1x128xf32>
    %7 = vector.shape_cast %6 : vector<1x128xf32> to vector<1x1x128xf32>
    %c0_4 = arith.constant 0 : index
    %c0_5 = arith.constant 0 : index
    %c0_6 = arith.constant 0 : index
    %8 = vector.load %arg3[%c0_4, %c0_5, %c0_6] : memref<1x1x128xf32, #tpu.memory_space<vmem>>, vector<1x1x128xf32>
    tpu.vector_store %arg3[%c0_4, %c0_5, %c0_6], %7 {strides = array<i32>} : memref<1x1x128xf32, #tpu.memory_space<vmem>>, vector<1x1x128xf32>,
    return
  }
  func.func @transform_0(%arg0: i32) -> (i32, i32) {
    %c0_i32 = arith.constant 0 : i32
    %c0_i32_0 = arith.constant 0 : i32
    return %arg0, %c0_i32 : i32, i32
  }
  func.func @transform_1(%arg0: i32) -> (i32, i32) {
    %c0_i32 = arith.constant 0 : i32
    %c0_i32_0 = arith.constant 0 : i32
    return %arg0, %c0_i32 : i32, i32
  }
  func.func @transform_2(%arg0: i32) -> (i32, i32, i32) {
    %c0_i32 = arith.constant 0 : i32
    %c0_i32_0 = arith.constant 0 : i32
    %c0_i32_1 = arith.constant 0 : i32
    return %arg0, %c0_i32, %c0_i32_0 : i32, i32, i32
  }
}

</mosaic_0001>

<llo_original>
// kernel: tpu_custom_call.1
$region0: #{tpu_custom_call.1}
  #allocation0 [shape = 'u32[]', space=smem, size = 0x4, offset = 0x4, fixed_abs, tag = 'smem constant byte address 0x4 - core index']
  #allocation1 [shape = 'u32[144,128]{1,0:T(1,128)}', space=vmem, size = 0x12000, scoped, tag = 'internal scratch']
  %s0 = inlined_call_operand.hbm [shape: f32[1024,128], index: 0, kind: input, shape index: {}]
  %s1 = inlined_call_operand.hbm [shape: f32[1024,128], index: 1, kind: input, shape index: {}]
  %s2 = inlined_call_operand.hbm [shape: f32[1,1,128], index: 2, kind: output, shape index: {}]
  %s3 = sld [smem:[#allocation0]]
  $region26: #{tpu_custom_call.1} parent=0
    _
  %s5 = ssub.s32 1, %s3
  %s6 = scalar_select 0, %s5, %s3
  $region1: #{tpu_custom_call.1} parent=0
    #allocation2 [shape = 'u8[524288]{0}', space=vmem, size = 0x80000, scoped, tag = 'input window, operand 0, single buffered']
    #allocation3 [shape = 's32[1]{0}', space=sflag, size = 0x4, scoped, tag = 'scoped memory for tpu_custom_call.1']
    #allocation4 [shape = 's32[1]{0}', space=sflag, size = 0x4, scoped, tag = 'scoped memory for tpu_custom_call.1']
    #allocation5 [shape = 'u8[524288]{0}', space=vmem, size = 0x80000, scoped, tag = 'input window, operand 1, single buffered']
    #allocation6 [shape = 's32[1]{0}', space=sflag, size = 0x4, scoped, tag = 'scoped memory for tpu_custom_call.1']
    #allocation7 [shape = 'u8[512]{0}', space=vmem, size = 0x400, scoped, tag = 'output window, operand 0, single buffered']
    %7 = vsyncpa [#allocation3], 0
    %8 = vsyncpa [#allocation6], 0
    %9 = vsyncpa [#allocation4], 0
    // Predicated region
    $region2: #{tpu_custom_call.1} parent=1 // pred_check
      _
    $region3: #{tpu_custom_call.1} parent=1 // pred_check_branch
      %11 = sbr.rel (0) target = $region5
    $region4: #{tpu_custom_call.1} parent=1 // pred_region
      %s13 = ssub.s32 16384, 16384
      %14 = vsyncadd [#allocation3], %s13
      %s15 = sshll.u32 [#allocation2], 4
      %s16 = int_to_ptr.vmem [resolvable:$true] %s15
      %21 = dma.hbm_to_vmem [thread:$0]  %s0, 16384, %s16, [#allocation3], 128, 128, 8
    $region5: #{tpu_custom_call.1} parent=1 // pred_fallthru
      _
    // Predicated region
    $region6: #{tpu_custom_call.1} parent=1 // pred_check
      _
    $region7: #{tpu_custom_call.1} parent=1 // pred_check_branch
      %23 = sbr.rel (0) target = $region9
    $region8: #{tpu_custom_call.1} parent=1 // pred_region
      %s25 = ssub.s32 16384, 16384
      %26 = vsyncadd [#allocation6], %s25
      %s27 = sshll.u32 [#allocation5], 4
      %s28 = int_to_ptr.vmem [resolvable:$true] %s27
      %33 = dma.hbm_to_vmem [thread:$0]  %s1, 16384, %s28, [#allocation6], 128, 128, 8
    $region9: #{tpu_custom_call.1} parent=1 // pred_fallthru
      _
    // Predicated region
    $region10: #{tpu_custom_call.1} parent=1 // pred_check
      _
    $region11: #{tpu_custom_call.1} parent=1 // pred_check_branch
      %35 = sbr.rel (0) target = $region13
    $region12: #{tpu_custom_call.1} parent=1 // pred_region
      %36 = dma.done [#allocation3], 16384
    $region13: #{tpu_custom_call.1} parent=1 // pred_fallthru
      _
    // Predicated region
    $region14: #{tpu_custom_call.1} parent=1 // pred_check
      _
    $region15: #{tpu_custom_call.1} parent=1 // pred_check_branch
      %38 = sbr.rel (0) target = $region17
    $region16: #{tpu_custom_call.1} parent=1 // pred_region
      %39 = dma.done [#allocation6], 16384
    $region17: #{tpu_custom_call.1} parent=1 // pred_fallthru
      _
    %v40 = vld [vmem:[#allocation2] sm:$0xff]
    %v41 = vld [vmem:[#allocation2 + $0x8] sm:$0xff]
    %v42 = vld [vmem:[#allocation2 + $0x10] sm:$0xff]
    %v43 = vld [vmem:[#allocation2 + $0x18] sm:$0xff]
    %v44 = vld [vmem:[#allocation2 + $0x20] sm:$0xff]
    %v45 = vld [vmem:[#allocation2 + $0x28] sm:$0xff]
    %v46 = vld [vmem:[#allocation2 + $0x30] sm:$0xff]
    %v47 = vld [vmem:[#allocation2 + $0x38] sm:$0xff]
    %v48 = vld [vmem:[#allocation2 + $0x40] sm:$0xff]
    %v49 = vld [vmem:[#allocation2 + $0x48] sm:$0xff]
    %v50 = vld [vmem:[#allocation2 + $0x50] sm:$0xff]
    %v51 = vld [vmem:[#allocation2 + $0x58] sm:$0xff]
    %v52 = vld [vmem:[#allocation2 + $0x60] sm:$0xff]
    %v53 = vld [vmem:[#allocation2 + $0x68] sm:$0xff]
    %v54 = vld [vmem:[#allocation2 + $0x70] sm:$0xff]
    %v55 = vld [vmem:[#allocation2 + $0x78] sm:$0xff]
    %v56 = vld [vmem:[#allocation2 + $0x80] sm:$0xff]
    %v57 = vld [vmem:[#allocation2 + $0x88] sm:$0xff]
    %v58 = vld [vmem:[#allocation2 + $0x90] sm:$0xff]
    %v59 = vld [vmem:[#allocation2 + $0x98] sm:$0xff]
    %v60 = vld [vmem:[#allocation2 + $0xa0] sm:$0xff]
    %v61 = vld [vmem:[#allocation2 + $0xa8] sm:$0xff]
    %v62 = vld [vmem:[#allocation2 + $0xb0] sm:$0xff]
    %v63 = vld [vmem:[#allocation2 + $0xb8] sm:$0xff]
    %v64 = vld [vmem:[#allocation2 + $0xc0] sm:$0xff]
    %v65 = vld [vmem:[#allocation2 + $0xc8] sm:$0xff]
    %v66 = vld [vmem:[#allocation2 + $0xd0] sm:$0xff]
    %v67 = vld [vmem:[#allocation2 + $0xd8] sm:$0xff]
    %v68 = vld [vmem:[#allocation2 + $0xe0] sm:$0xff]
    %v69 = vld [vmem:[#allocation2 + $0xe8] sm:$0xff]
    %v70 = vld [vmem:[#allocation2 + $0xf0] sm:$0xff]
    %v71 = vld [vmem:[#allocation2 + $0xf8] sm:$0xff]
    %v72 = vld [vmem:[#allocation2 + $0x100] sm:$0xff]
    %v73 = vld [vmem:[#allocation2 + $0x108] sm:$0xff]
    %v74 = vld [vmem:[#allocation2 + $0x110] sm:$0xff]
    %v75 = vld [vmem:[#allocation2 + $0x118] sm:$0xff]
    %v76 = vld [vmem:[#allocation2 + $0x120] sm:$0xff]
    %v77 = vld [vmem:[#allocation2 + $0x128] sm:$0xff]
    %v78 = vld [vmem:[#allocation2 + $0x130] sm:$0xff]
    %v79 = vld [vmem:[#allocation2 + $0x138] sm:$0xff]
    %v80 = vld [vmem:[#allocation2 + $0x140] sm:$0xff]
    %v81 = vld [vmem:[#allocation2 + $0x148] sm:$0xff]
    %v82 = vld [vmem:[#allocation2 + $0x150] sm:$0xff]
    %v83 = vld [vmem:[#allocation2 + $0x158] sm:$0xff]
    %v84 = vld [vmem:[#allocation2 + $0x160] sm:$0xff]
    %v85 = vld [vmem:[#allocation2 + $0x168] sm:$0xff]
    %v86 = vld [vmem:[#allocation2 + $0x170] sm:$0xff]
    %v87 = vld [vmem:[#allocation2 + $0x178] sm:$0xff]
    %v88 = vld [vmem:[#allocation2 + $0x180] sm:$0xff]
    %v89 = vld [vmem:[#allocation2 + $0x188] sm:$0xff]
    %v90 = vld [vmem:[#allocation2 + $0x190] sm:$0xff]
    %v91 = vld [vmem:[#allocation2 + $0x198] sm:$0xff]
    %v92 = vld [vmem:[#allocation2 + $0x1a0] sm:$0xff]
    %v93 = vld [vmem:[#allocation2 + $0x1a8] sm:$0xff]
    %v94 = vld [vmem:[#allocation2 + $0x1b0] sm:$0xff]
    %v95 = vld [vmem:[#allocation2 + $0x1b8] sm:$0xff]
    %v96 = vld [vmem:[#allocation2 + $0x1c0] sm:$0xff]
    %v97 = vld [vmem:[#allocation2 + $0x1c8] sm:$0xff]
    %v98 = vld [vmem:[#allocation2 + $0x1d0] sm:$0xff]
    %v99 = vld [vmem:[#allocation2 + $0x1d8] sm:$0xff]
    %v100 = vld [vmem:[#allocation2 + $0x1e0] sm:$0xff]
    %v101 = vld [vmem:[#allocation2 + $0x1e8] sm:$0xff]
    %v102 = vld [vmem:[#allocation2 + $0x1f0] sm:$0xff]
    %v103 = vld [vmem:[#allocation2 + $0x1f8] sm:$0xff]
    %v104 = vld [vmem:[#allocation2 + $0x200] sm:$0xff]
    %v105 = vld [vmem:[#allocation2 + $0x208] sm:$0xff]
    %v106 = vld [vmem:[#allocation2 + $0x210] sm:$0xff]
    %v107 = vld [vmem:[#allocation2 + $0x218] sm:$0xff]
    %v108 = vld [vmem:[#allocation2 + $0x220] sm:$0xff]
    %v109 = vld [vmem:[#allocation2 + $0x228] sm:$0xff]
    %v110 = vld [vmem:[#allocation2 + $0x230] sm:$0xff]
    %v111 = vld [vmem:[#allocation2 + $0x238] sm:$0xff]
    %v112 = vld [vmem:[#allocation2 + $0x240] sm:$0xff]
    %v113 = vld [vmem:[#allocation2 + $0x248] sm:$0xff]
    %v114 = vld [vmem:[#allocation2 + $0x250] sm:$0xff]
    %v115 = vld [vmem:[#allocation2 + $0x258] sm:$0xff]
    %v116 = vld [vmem:[#allocation2 + $0x260] sm:$0xff]
    %v117 = vld [vmem:[#allocation2 + $0x268] sm:$0xff]
    %v118 = vld [vmem:[#allocation2 + $0x270] sm:$0xff]
    %v119 = vld [vmem:[#allocation2 + $0x278] sm:$0xff]
    %v120 = vld [vmem:[#allocation2 + $0x280] sm:$0xff]
    %v121 = vld [vmem:[#allocation2 + $0x288] sm:$0xff]
    %v122 = vld [vmem:[#allocation2 + $0x290] sm:$0xff]
    %v123 = vld [vmem:[#allocation2 + $0x298] sm:$0xff]
    %v124 = vld [vmem:[#allocation2 + $0x2a0] sm:$0xff]
    %v125 = vld [vmem:[#allocation2 + $0x2a8] sm:$0xff]
    %v126 = vld [vmem:[#allocation2 + $0x2b0] sm:$0xff]
    %v127 = vld [vmem:[#allocation2 + $0x2b8] sm:$0xff]
    %v128 = vld [vmem:[#allocation2 + $0x2c0] sm:$0xff]
    %v129 = vld [vmem:[#allocation2 + $0x2c8] sm:$0xff]
    %v130 = vld [vmem:[#allocation2 + $0x2d0] sm:$0xff]
    %v131 = vld [vmem:[#allocation2 + $0x2d8] sm:$0xff]
    %v132 = vld [vmem:[#allocation2 + $0x2e0] sm:$0xff]
    %v133 = vld [vmem:[#allocation2 + $0x2e8] sm:$0xff]
    %v134 = vld [vmem:[#allocation2 + $0x2f0] sm:$0xff]
    %v135 = vld [vmem:[#allocation2 + $0x2f8] sm:$0xff]
    %v136 = vld [vmem:[#allocation2 + $0x300] sm:$0xff]
    %v137 = vld [vmem:[#allocation2 + $0x308] sm:$0xff]
    %v138 = vld [vmem:[#allocation2 + $0x310] sm:$0xff]
    %v139 = vld [vmem:[#allocation2 + $0x318] sm:$0xff]
    %v140 = vld [vmem:[#allocation2 + $0x320] sm:$0xff]
    %v141 = vld [vmem:[#allocation2 + $0x328] sm:$0xff]
    %v142 = vld [vmem:[#allocation2 + $0x330] sm:$0xff]
    %v143 = vld [vmem:[#allocation2 + $0x338] sm:$0xff]
    %v144 = vld [vmem:[#allocation2 + $0x340] sm:$0xff]
    %v145 = vld [vmem:[#allocation2 + $0x348] sm:$0xff]
    %v146 = vld [vmem:[#allocation2 + $0x350] sm:$0xff]
    %v147 = vld [vmem:[#allocation2 + $0x358] sm:$0xff]
    %v148 = vld [vmem:[#allocation2 + $0x360] sm:$0xff]
    %v149 = vld [vmem:[#allocation2 + $0x368] sm:$0xff]
    %v150 = vld [vmem:[#allocation2 + $0x370] sm:$0xff]
    %v151 = vld [vmem:[#allocation2 + $0x378] sm:$0xff]
    %v152 = vld [vmem:[#allocation2 + $0x380] sm:$0xff]
    %v153 = vld [vmem:[#allocation2 + $0x388] sm:$0xff]
    %v154 = vld [vmem:[#allocation2 + $0x390] sm:$0xff]
    %v155 = vld [vmem:[#allocation2 + $0x398] sm:$0xff]
    %v156 = vld [vmem:[#allocation2 + $0x3a0] sm:$0xff]
    %v157 = vld [vmem:[#allocation2 + $0x3a8] sm:$0xff]
    %v158 = vld [vmem:[#allocation2 + $0x3b0] sm:$0xff]
    %v159 = vld [vmem:[#allocation2 + $0x3b8] sm:$0xff]
    %v160 = vld [vmem:[#allocation2 + $0x3c0] sm:$0xff]
    %v161 = vld [vmem:[#allocation2 + $0x3c8] sm:$0xff]
    %v162 = vld [vmem:[#allocation2 + $0x3d0] sm:$0xff]
    %v163 = vld [vmem:[#allocation2 + $0x3d8] sm:$0xff]
    %v164 = vld [vmem:[#allocation2 + $0x3e0] sm:$0xff]
    %v165 = vld [vmem:[#allocation2 + $0x3e8] sm:$0xff]
    %v166 = vld [vmem:[#allocation2 + $0x3f0] sm:$0xff]
    %v167 = vld [vmem:[#allocation2 + $0x3f8] sm:$0xff]
    %v168 = vld [vmem:[#allocation5] sm:$0xff]
    %v169 = vld [vmem:[#allocation5 + $0x8] sm:$0xff]
    %v170 = vld [vmem:[#allocation5 + $0x10] sm:$0xff]
    %v171 = vld [vmem:[#allocation5 + $0x18] sm:$0xff]
    %v172 = vld [vmem:[#allocation5 + $0x20] sm:$0xff]
    %v173 = vld [vmem:[#allocation5 + $0x28] sm:$0xff]
    %v174 = vld [vmem:[#allocation5 + $0x30] sm:$0xff]
    %v175 = vld [vmem:[#allocation5 + $0x38] sm:$0xff]
    %v176 = vld [vmem:[#allocation5 + $0x40] sm:$0xff]
    %v177 = vld [vmem:[#allocation5 + $0x48] sm:$0xff]
    %v178 = vld [vmem:[#allocation5 + $0x50] sm:$0xff]
    %v179 = vld [vmem:[#allocation5 + $0x58] sm:$0xff]
    %v180 = vld [vmem:[#allocation5 + $0x60] sm:$0xff]
    %v181 = vld [vmem:[#allocation5 + $0x68] sm:$0xff]
    %v182 = vld [vmem:[#allocation5 + $0x70] sm:$0xff]
    %v183 = vld [vmem:[#allocation5 + $0x78] sm:$0xff]
    %v184 = vld [vmem:[#allocation5 + $0x80] sm:$0xff]
    %v185 = vld [vmem:[#allocation5 + $0x88] sm:$0xff]
    %v186 = vld [vmem:[#allocation5 + $0x90] sm:$0xff]
    %v187 = vld [vmem:[#allocation5 + $0x98] sm:$0xff]
    %v188 = vld [vmem:[#allocation5 + $0xa0] sm:$0xff]
    %v189 = vld [vmem:[#allocation5 + $0xa8] sm:$0xff]
    %v190 = vld [vmem:[#allocation5 + $0xb0] sm:$0xff]
    %v191 = vld [vmem:[#allocation5 + $0xb8] sm:$0xff]
    %v192 = vld [vmem:[#allocation5 + $0xc0] sm:$0xff]
    %v193 = vld [vmem:[#allocation5 + $0xc8] sm:$0xff]
    %v194 = vld [vmem:[#allocation5 + $0xd0] sm:$0xff]
    %v195 = vld [vmem:[#allocation5 + $0xd8] sm:$0xff]
    %v196 = vld [vmem:[#allocation5 + $0xe0] sm:$0xff]
    %v197 = vld [vmem:[#allocation5 + $0xe8] sm:$0xff]
    %v198 = vld [vmem:[#allocation5 + $0xf0] sm:$0xff]
    %v199 = vld [vmem:[#allocation5 + $0xf8] sm:$0xff]
    %v200 = vld [vmem:[#allocation5 + $0x100] sm:$0xff]
    %v201 = vld [vmem:[#allocation5 + $0x108] sm:$0xff]
    %v202 = vld [vmem:[#allocation5 + $0x110] sm:$0xff]
    %v203 = vld [vmem:[#allocation5 + $0x118] sm:$0xff]
    %v204 = vld [vmem:[#allocation5 + $0x120] sm:$0xff]
    %v205 = vld [vmem:[#allocation5 + $0x128] sm:$0xff]
    %v206 = vld [vmem:[#allocation5 + $0x130] sm:$0xff]
    %v207 = vld [vmem:[#allocation5 + $0x138] sm:$0xff]
    %v208 = vld [vmem:[#allocation5 + $0x140] sm:$0xff]
    %v209 = vld [vmem:[#allocation5 + $0x148] sm:$0xff]
    %v210 = vld [vmem:[#allocation5 + $0x150] sm:$0xff]
    %v211 = vld [vmem:[#allocation5 + $0x158] sm:$0xff]
    %v212 = vld [vmem:[#allocation5 + $0x160] sm:$0xff]
    %v213 = vld [vmem:[#allocation5 + $0x168] sm:$0xff]
    %v214 = vld [vmem:[#allocation5 + $0x170] sm:$0xff]
    %v215 = vld [vmem:[#allocation5 + $0x178] sm:$0xff]
    %v216 = vld [vmem:[#allocation5 + $0x180] sm:$0xff]
    %v217 = vld [vmem:[#allocation5 + $0x188] sm:$0xff]
    %v218 = vld [vmem:[#allocation5 + $0x190] sm:$0xff]
    %v219 = vld [vmem:[#allocation5 + $0x198] sm:$0xff]
    %v220 = vld [vmem:[#allocation5 + $0x1a0] sm:$0xff]
    %v221 = vld [vmem:[#allocation5 + $0x1a8] sm:$0xff]
    %v222 = vld [vmem:[#allocation5 + $0x1b0] sm:$0xff]
    %v223 = vld [vmem:[#allocation5 + $0x1b8] sm:$0xff]
    %v224 = vld [vmem:[#allocation5 + $0x1c0] sm:$0xff]
    %v225 = vld [vmem:[#allocation5 + $0x1c8] sm:$0xff]
    %v226 = vld [vmem:[#allocation5 + $0x1d0] sm:$0xff]
    %v227 = vld [vmem:[#allocation5 + $0x1d8] sm:$0xff]
    %v228 = vld [vmem:[#allocation5 + $0x1e0] sm:$0xff]
    %v229 = vld [vmem:[#allocation5 + $0x1e8] sm:$0xff]
    %v230 = vld [vmem:[#allocation5 + $0x1f0] sm:$0xff]
    %v231 = vld [vmem:[#allocation5 + $0x1f8] sm:$0xff]
    %v232 = vld [vmem:[#allocation5 + $0x200] sm:$0xff]
    %v233 = vld [vmem:[#allocation5 + $0x208] sm:$0xff]
    %v234 = vld [vmem:[#allocation5 + $0x210] sm:$0xff]
    %v235 = vld [vmem:[#allocation5 + $0x218] sm:$0xff]
    %v236 = vld [vmem:[#allocation5 + $0x220] sm:$0xff]
    %v237 = vld [vmem:[#allocation5 + $0x228] sm:$0xff]
    %v238 = vld [vmem:[#allocation5 + $0x230] sm:$0xff]
    %v239 = vld [vmem:[#allocation5 + $0x238] sm:$0xff]
    %v240 = vld [vmem:[#allocation5 + $0x240] sm:$0xff]
    %v241 = vld [vmem:[#allocation5 + $0x248] sm:$0xff]
    %v242 = vld [vmem:[#allocation5 + $0x250] sm:$0xff]
    %v243 = vld [vmem:[#allocation5 + $0x258] sm:$0xff]
    %v244 = vld [vmem:[#allocation5 + $0x260] sm:$0xff]
    %v245 = vld [vmem:[#allocation5 + $0x268] sm:$0xff]
    %v246 = vld [vmem:[#allocation5 + $0x270] sm:$0xff]
    %v247 = vld [vmem:[#allocation5 + $0x278] sm:$0xff]
    %v248 = vld [vmem:[#allocation5 + $0x280] sm:$0xff]
    %v249 = vld [vmem:[#allocation5 + $0x288] sm:$0xff]
    %v250 = vld [vmem:[#allocation5 + $0x290] sm:$0xff]
    %v251 = vld [vmem:[#allocation5 + $0x298] sm:$0xff]
    %v252 = vld [vmem:[#allocation5 + $0x2a0] sm:$0xff]
    %v253 = vld [vmem:[#allocation5 + $0x2a8] sm:$0xff]
    %v254 = vld [vmem:[#allocation5 + $0x2b0] sm:$0xff]
    %v255 = vld [vmem:[#allocation5 + $0x2b8] sm:$0xff]
    %v256 = vld [vmem:[#allocation5 + $0x2c0] sm:$0xff]
    %v257 = vld [vmem:[#allocation5 + $0x2c8] sm:$0xff]
    %v258 = vld [vmem:[#allocation5 + $0x2d0] sm:$0xff]
    %v259 = vld [vmem:[#allocation5 + $0x2d8] sm:$0xff]
    %v260 = vld [vmem:[#allocation5 + $0x2e0] sm:$0xff]
    %v261 = vld [vmem:[#allocation5 + $0x2e8] sm:$0xff]
    %v262 = vld [vmem:[#allocation5 + $0x2f0] sm:$0xff]
    %v263 = vld [vmem:[#allocation5 + $0x2f8] sm:$0xff]
    %v264 = vld [vmem:[#allocation5 + $0x300] sm:$0xff]
    %v265 = vld [vmem:[#allocation5 + $0x308] sm:$0xff]
    %v266 = vld [vmem:[#allocation5 + $0x310] sm:$0xff]
    %v267 = vld [vmem:[#allocation5 + $0x318] sm:$0xff]
    %v268 = vld [vmem:[#allocation5 + $0x320] sm:$0xff]
    %v269 = vld [vmem:[#allocation5 + $0x328] sm:$0xff]
    %v270 = vld [vmem:[#allocation5 + $0x330] sm:$0xff]
    %v271 = vld [vmem:[#allocation5 + $0x338] sm:$0xff]
    %v272 = vld [vmem:[#allocation5 + $0x340] sm:$0xff]
    %v273 = vld [vmem:[#allocation5 + $0x348] sm:$0xff]
    %v274 = vld [vmem:[#allocation5 + $0x350] sm:$0xff]
    %v275 = vld [vmem:[#allocation5 + $0x358] sm:$0xff]
    %v276 = vld [vmem:[#allocation5 + $0x360] sm:$0xff]
    %v277 = vld [vmem:[#allocation5 + $0x368] sm:$0xff]
    %v278 = vld [vmem:[#allocation5 + $0x370] sm:$0xff]
    %v279 = vld [vmem:[#allocation5 + $0x378] sm:$0xff]
    %v280 = vld [vmem:[#allocation5 + $0x380] sm:$0xff]
    %v281 = vld [vmem:[#allocation5 + $0x388] sm:$0xff]
    %v282 = vld [vmem:[#allocation5 + $0x390] sm:$0xff]
    %v283 = vld [vmem:[#allocation5 + $0x398] sm:$0xff]
    %v284 = vld [vmem:[#allocation5 + $0x3a0] sm:$0xff]
    %v285 = vld [vmem:[#allocation5 + $0x3a8] sm:$0xff]
    %v286 = vld [vmem:[#allocation5 + $0x3b0] sm:$0xff]
    %v287 = vld [vmem:[#allocation5 + $0x3b8] sm:$0xff]
    %v288 = vld [vmem:[#allocation5 + $0x3c0] sm:$0xff]
    %v289 = vld [vmem:[#allocation5 + $0x3c8] sm:$0xff]
    %v290 = vld [vmem:[#allocation5 + $0x3d0] sm:$0xff]
    %v291 = vld [vmem:[#allocation5 + $0x3d8] sm:$0xff]
    %v292 = vld [vmem:[#allocation5 + $0x3e0] sm:$0xff]
    %v293 = vld [vmem:[#allocation5 + $0x3e8] sm:$0xff]
    %v294 = vld [vmem:[#allocation5 + $0x3f0] sm:$0xff]
    %v295 = vld [vmem:[#allocation5 + $0x3f8] sm:$0xff]
    %v296 = vsub.f32 1.0, %v168
    %v297 = vsub.f32 1.0, %v169
    %v298 = vsub.f32 1.0, %v170
    %v299 = vsub.f32 1.0, %v171
    %v300 = vsub.f32 1.0, %v172
    %v301 = vsub.f32 1.0, %v173
    %v302 = vsub.f32 1.0, %v174
    %v303 = vsub.f32 1.0, %v175
    %v304 = vsub.f32 1.0, %v176
    %v305 = vsub.f32 1.0, %v177
    %v306 = vsub.f32 1.0, %v178
    %v307 = vsub.f32 1.0, %v179
    %v308 = vsub.f32 1.0, %v180
    %v309 = vsub.f32 1.0, %v181
    %v310 = vsub.f32 1.0, %v182
    %v311 = vsub.f32 1.0, %v183
    %v312 = vsub.f32 1.0, %v184
    %v313 = vsub.f32 1.0, %v185
    %v314 = vsub.f32 1.0, %v186
    %v315 = vsub.f32 1.0, %v187
    %v316 = vsub.f32 1.0, %v188
    %v317 = vsub.f32 1.0, %v189
    %v318 = vsub.f32 1.0, %v190
    %v319 = vsub.f32 1.0, %v191
    %v320 = vsub.f32 1.0, %v192
    %v321 = vsub.f32 1.0, %v193
    %v322 = vsub.f32 1.0, %v194
    %v323 = vsub.f32 1.0, %v195
    %v324 = vsub.f32 1.0, %v196
    %v325 = vsub.f32 1.0, %v197
    %v326 = vsub.f32 1.0, %v198
    %v327 = vsub.f32 1.0, %v199
    %v328 = vsub.f32 1.0, %v200
    %v329 = vsub.f32 1.0, %v201
    %v330 = vsub.f32 1.0, %v202
    %v331 = vsub.f32 1.0, %v203
    %v332 = vsub.f32 1.0, %v204
    %v333 = vsub.f32 1.0, %v205
    %v334 = vsub.f32 1.0, %v206
    %v335 = vsub.f32 1.0, %v207
    %v336 = vsub.f32 1.0, %v208
    %v337 = vsub.f32 1.0, %v209
    %v338 = vsub.f32 1.0, %v210
    %v339 = vsub.f32 1.0, %v211
    %v340 = vsub.f32 1.0, %v212
    %v341 = vsub.f32 1.0, %v213
    %v342 = vsub.f32 1.0, %v214
    %v343 = vsub.f32 1.0, %v215
    %v344 = vsub.f32 1.0, %v216
    %v345 = vsub.f32 1.0, %v217
    %v346 = vsub.f32 1.0, %v218
    %v347 = vsub.f32 1.0, %v219
    %v348 = vsub.f32 1.0, %v220
    %v349 = vsub.f32 1.0, %v221
    %v350 = vsub.f32 1.0, %v222
    %v351 = vsub.f32 1.0, %v223
    %v352 = vsub.f32 1.0, %v224
    %v353 = vsub.f32 1.0, %v225
    %v354 = vsub.f32 1.0, %v226
    %v355 = vsub.f32 1.0, %v227
    %v356 = vsub.f32 1.0, %v228
    %v357 = vsub.f32 1.0, %v229
    %v358 = vsub.f32 1.0, %v230
    %v359 = vsub.f32 1.0, %v231
    %v360 = vsub.f32 1.0, %v232
    %v361 = vsub.f32 1.0, %v233
    %v362 = vsub.f32 1.0, %v234
    %v363 = vsub.f32 1.0, %v235
    %v364 = vsub.f32 1.0, %v236
    %v365 = vsub.f32 1.0, %v237
    %v366 = vsub.f32 1.0, %v238
    %v367 = vsub.f32 1.0, %v239
    %v368 = vsub.f32 1.0, %v240
    %v369 = vsub.f32 1.0, %v241
    %v370 = vsub.f32 1.0, %v242
    %v371 = vsub.f32 1.0, %v243
    %v372 = vsub.f32 1.0, %v244
    %v373 = vsub.f32 1.0, %v245
    %v374 = vsub.f32 1.0, %v246
    %v375 = vsub.f32 1.0, %v247
    %v376 = vsub.f32 1.0, %v248
    %v377 = vsub.f32 1.0, %v249
    %v378 = vsub.f32 1.0, %v250
    %v379 = vsub.f32 1.0, %v251
    %v380 = vsub.f32 1.0, %v252
    %v381 = vsub.f32 1.0, %v253
    %v382 = vsub.f32 1.0, %v254
    %v383 = vsub.f32 1.0, %v255
    %v384 = vsub.f32 1.0, %v256
    %v385 = vsub.f32 1.0, %v257
    %v386 = vsub.f32 1.0, %v258
    %v387 = vsub.f32 1.0, %v259
    %v388 = vsub.f32 1.0, %v260
    %v389 = vsub.f32 1.0, %v261
    %v390 = vsub.f32 1.0, %v262
    %v391 = vsub.f32 1.0, %v263
    %v392 = vsub.f32 1.0, %v264
    %v393 = vsub.f32 1.0, %v265
    %v394 = vsub.f32 1.0, %v266
    %v395 = vsub.f32 1.0, %v267
    %v396 = vsub.f32 1.0, %v268
    %v397 = vsub.f32 1.0, %v269
    %v398 = vsub.f32 1.0, %v270
    %v399 = vsub.f32 1.0, %v271
    %v400 = vsub.f32 1.0, %v272
    %v401 = vsub.f32 1.0, %v273
    %v402 = vsub.f32 1.0, %v274
    %v403 = vsub.f32 1.0, %v275
    %v404 = vsub.f32 1.0, %v276
    %v405 = vsub.f32 1.0, %v277
    %v406 = vsub.f32 1.0, %v278
    %v407 = vsub.f32 1.0, %v279
    %v408 = vsub.f32 1.0, %v280
    %v409 = vsub.f32 1.0, %v281
    %v410 = vsub.f32 1.0, %v282
    %v411 = vsub.f32 1.0, %v283
    %v412 = vsub.f32 1.0, %v284
    %v413 = vsub.f32 1.0, %v285
    %v414 = vsub.f32 1.0, %v286
    %v415 = vsub.f32 1.0, %v287
    %v416 = vsub.f32 1.0, %v288
    %v417 = vsub.f32 1.0, %v289
    %v418 = vsub.f32 1.0, %v290
    %v419 = vsub.f32 1.0, %v291
    %v420 = vsub.f32 1.0, %v292
    %v421 = vsub.f32 1.0, %v293
    %v422 = vsub.f32 1.0, %v294
    %v423 = vsub.f32 1.0, %v295
    %v424 = vmul.f32 %v40, %v296
    %v425 = vmul.f32 %v41, %v297
    %v426 = vmul.f32 %v42, %v298
    %v427 = vmul.f32 %v43, %v299
    %v428 = vmul.f32 %v44, %v300
    %v429 = vmul.f32 %v45, %v301
    %v430 = vmul.f32 %v46, %v302
    %v431 = vmul.f32 %v47, %v303
    %v432 = vmul.f32 %v48, %v304
    %v433 = vmul.f32 %v49, %v305
    %v434 = vmul.f32 %v50, %v306
    %v435 = vmul.f32 %v51, %v307
    %v436 = vmul.f32 %v52, %v308
    %v437 = vmul.f32 %v53, %v309
    %v438 = vmul.f32 %v54, %v310
    %v439 = vmul.f32 %v55, %v311
    %v440 = vmul.f32 %v56, %v312
    %v441 = vmul.f32 %v57, %v313
    %v442 = vmul.f32 %v58, %v314
    %v443 = vmul.f32 %v59, %v315
    %v444 = vmul.f32 %v60, %v316
    %v445 = vmul.f32 %v61, %v317
    %v446 = vmul.f32 %v62, %v318
    %v447 = vmul.f32 %v63, %v319
    %v448 = vmul.f32 %v64, %v320
    %v449 = vmul.f32 %v65, %v321
    %v450 = vmul.f32 %v66, %v322
    %v451 = vmul.f32 %v67, %v323
    %v452 = vmul.f32 %v68, %v324
    %v453 = vmul.f32 %v69, %v325
    %v454 = vmul.f32 %v70, %v326
    %v455 = vmul.f32 %v71, %v327
    %v456 = vmul.f32 %v72, %v328
    %v457 = vmul.f32 %v73, %v329
    %v458 = vmul.f32 %v74, %v330
    %v459 = vmul.f32 %v75, %v331
    %v460 = vmul.f32 %v76, %v332
    %v461 = vmul.f32 %v77, %v333
    %v462 = vmul.f32 %v78, %v334
    %v463 = vmul.f32 %v79, %v335
    %v464 = vmul.f32 %v80, %v336
    %v465 = vmul.f32 %v81, %v337
    %v466 = vmul.f32 %v82, %v338
    %v467 = vmul.f32 %v83, %v339
    %v468 = vmul.f32 %v84, %v340
    %v469 = vmul.f32 %v85, %v341
    %v470 = vmul.f32 %v86, %v342
    %v471 = vmul.f32 %v87, %v343
    %v472 = vmul.f32 %v88, %v344
    %v473 = vmul.f32 %v89, %v345
    %v474 = vmul.f32 %v90, %v346
    %v475 = vmul.f32 %v91, %v347
    %v476 = vmul.f32 %v92, %v348
    %v477 = vmul.f32 %v93, %v349
    %v478 = vmul.f32 %v94, %v350
    %v479 = vmul.f32 %v95, %v351
    %v480 = vmul.f32 %v96, %v352
    %v481 = vmul.f32 %v97, %v353
    %v482 = vmul.f32 %v98, %v354
    %v483 = vmul.f32 %v99, %v355
    %v484 = vmul.f32 %v100, %v356
    %v485 = vmul.f32 %v101, %v357
    %v486 = vmul.f32 %v102, %v358
    %v487 = vmul.f32 %v103, %v359
    %v488 = vmul.f32 %v104, %v360
    %v489 = vmul.f32 %v105, %v361
    %v490 = vmul.f32 %v106, %v362
    %v491 = vmul.f32 %v107, %v363
    %v492 = vmul.f32 %v108, %v364
    %v493 = vmul.f32 %v109, %v365
    %v494 = vmul.f32 %v110, %v366
    %v495 = vmul.f32 %v111, %v367
    %v496 = vmul.f32 %v112, %v368
    %v497 = vmul.f32 %v113, %v369
    %v498 = vmul.f32 %v114, %v370
    %v499 = vmul.f32 %v115, %v371
    %v500 = vmul.f32 %v116, %v372
    %v501 = vmul.f32 %v117, %v373
    %v502 = vmul.f32 %v118, %v374
    %v503 = vmul.f32 %v119, %v375
    %v504 = vmul.f32 %v120, %v376
    %v505 = vmul.f32 %v121, %v377
    %v506 = vmul.f32 %v122, %v378
    %v507 = vmul.f32 %v123, %v379
    %v508 = vmul.f32 %v124, %v380
    %v509 = vmul.f32 %v125, %v381
    %v510 = vmul.f32 %v126, %v382
    %v511 = vmul.f32 %v127, %v383
    %v512 = vmul.f32 %v128, %v384
    %v513 = vmul.f32 %v129, %v385
    %v514 = vmul.f32 %v130, %v386
    %v515 = vmul.f32 %v131, %v387
    %v516 = vmul.f32 %v132, %v388
    %v517 = vmul.f32 %v133, %v389
    %v518 = vmul.f32 %v134, %v390
    %v519 = vmul.f32 %v135, %v391
    %v520 = vmul.f32 %v136, %v392
    %v521 = vmul.f32 %v137, %v393
    %v522 = vmul.f32 %v138, %v394
    %v523 = vmul.f32 %v139, %v395
    %v524 = vmul.f32 %v140, %v396
    %v525 = vmul.f32 %v141, %v397
    %v526 = vmul.f32 %v142, %v398
    %v527 = vmul.f32 %v143, %v399
    %v528 = vmul.f32 %v144, %v400
    %v529 = vmul.f32 %v145, %v401
    %v530 = vmul.f32 %v146, %v402
    %v531 = vmul.f32 %v147, %v403
    %v532 = vmul.f32 %v148, %v404
    %v533 = vmul.f32 %v149, %v405
    %v534 = vmul.f32 %v150, %v406
    %v535 = vmul.f32 %v151, %v407
    %v536 = vmul.f32 %v152, %v408
    %v537 = vmul.f32 %v153, %v409
    %v538 = vmul.f32 %v154, %v410
    %v539 = vmul.f32 %v155, %v411
    %v540 = vmul.f32 %v156, %v412
    %v541 = vmul.f32 %v157, %v413
    %v542 = vmul.f32 %v158, %v414
    %v543 = vmul.f32 %v159, %v415
    %v544 = vmul.f32 %v160, %v416
    %v545 = vmul.f32 %v161, %v417
    %v546 = vmul.f32 %v162, %v418
    %v547 = vmul.f32 %v163, %v419
    %v548 = vmul.f32 %v164, %v420
    %v549 = vmul.f32 %v165, %v421
    %v550 = vmul.f32 %v166, %v422
    %v551 = vmul.f32 %v167, %v423
    %v552 = vadd.f32 %v424, %v425
    %v553 = vadd.f32 %v552, %v426
    %v554 = vadd.f32 %v553, %v427
    %v555 = vadd.f32 %v554, %v428
    %v556 = vadd.f32 %v555, %v429
    %v557 = vadd.f32 %v556, %v430
    %v558 = vadd.f32 %v557, %v431
    %v559 = vadd.f32 %v558, %v432
    %v560 = vadd.f32 %v559, %v433
    %v561 = vadd.f32 %v560, %v434
    %v562 = vadd.f32 %v561, %v435
    %v563 = vadd.f32 %v562, %v436
    %v564 = vadd.f32 %v563, %v437
    %v565 = vadd.f32 %v564, %v438
    %v566 = vadd.f32 %v565, %v439
    %v567 = vadd.f32 %v566, %v440
    %v568 = vadd.f32 %v567, %v441
    %v569 = vadd.f32 %v568, %v442
    %v570 = vadd.f32 %v569, %v443
    %v571 = vadd.f32 %v570, %v444
    %v572 = vadd.f32 %v571, %v445
    %v573 = vadd.f32 %v572, %v446
    %v574 = vadd.f32 %v573, %v447
    %v575 = vadd.f32 %v574, %v448
    %v576 = vadd.f32 %v575, %v449
    %v577 = vadd.f32 %v576, %v450
    %v578 = vadd.f32 %v577, %v451
    %v579 = vadd.f32 %v578, %v452
    %v580 = vadd.f32 %v579, %v453
    %v581 = vadd.f32 %v580, %v454
    %v582 = vadd.f32 %v581, %v455
    %v583 = vadd.f32 %v582, %v456
    %v584 = vadd.f32 %v583, %v457
    %v585 = vadd.f32 %v584, %v458
    %v586 = vadd.f32 %v585, %v459
    %v587 = vadd.f32 %v586, %v460
    %v588 = vadd.f32 %v587, %v461
    %v589 = vadd.f32 %v588, %v462
    %v590 = vadd.f32 %v589, %v463
    %v591 = vadd.f32 %v590, %v464
    %v592 = vadd.f32 %v591, %v465
    %v593 = vadd.f32 %v592, %v466
    %v594 = vadd.f32 %v593, %v467
    %v595 = vadd.f32 %v594, %v468
    %v596 = vadd.f32 %v595, %v469
    %v597 = vadd.f32 %v596, %v470
    %v598 = vadd.f32 %v597, %v471
    %v599 = vadd.f32 %v598, %v472
    %v600 = vadd.f32 %v599, %v473
    %v601 = vadd.f32 %v600, %v474
    %v602 = vadd.f32 %v601, %v475
    %v603 = vadd.f32 %v602, %v476
    %v604 = vadd.f32 %v603, %v477
    %v605 = vadd.f32 %v604, %v478
    %v606 = vadd.f32 %v605, %v479
    %v607 = vadd.f32 %v606, %v480
    %v608 = vadd.f32 %v607, %v481
    %v609 = vadd.f32 %v608, %v482
    %v610 = vadd.f32 %v609, %v483
    %v611 = vadd.f32 %v610, %v484
    %v612 = vadd.f32 %v611, %v485
    %v613 = vadd.f32 %v612, %v486
    %v614 = vadd.f32 %v613, %v487
    %v615 = vadd.f32 %v614, %v488
    %v616 = vadd.f32 %v615, %v489
    %v617 = vadd.f32 %v616, %v490
    %v618 = vadd.f32 %v617, %v491
    %v619 = vadd.f32 %v618, %v492
    %v620 = vadd.f32 %v619, %v493
    %v621 = vadd.f32 %v620, %v494
    %v622 = vadd.f32 %v621, %v495
    %v623 = vadd.f32 %v622, %v496
    %v624 = vadd.f32 %v623, %v497
    %v625 = vadd.f32 %v624, %v498
    %v626 = vadd.f32 %v625, %v499
    %v627 = vadd.f32 %v626, %v500
    %v628 = vadd.f32 %v627, %v501
    %v629 = vadd.f32 %v628, %v502
    %v630 = vadd.f32 %v629, %v503
    %v631 = vadd.f32 %v630, %v504
    %v632 = vadd.f32 %v631, %v505
    %v633 = vadd.f32 %v632, %v506
    %v634 = vadd.f32 %v633, %v507
    %v635 = vadd.f32 %v634, %v508
    %v636 = vadd.f32 %v635, %v509
    %v637 = vadd.f32 %v636, %v510
    %v638 = vadd.f32 %v637, %v511
    %v639 = vadd.f32 %v638, %v512
    %v640 = vadd.f32 %v639, %v513
    %v641 = vadd.f32 %v640, %v514
    %v642 = vadd.f32 %v641, %v515
    %v643 = vadd.f32 %v642, %v516
    %v644 = vadd.f32 %v643, %v517
    %v645 = vadd.f32 %v644, %v518
    %v646 = vadd.f32 %v645, %v519
    %v647 = vadd.f32 %v646, %v520
    %v648 = vadd.f32 %v647, %v521
    %v649 = vadd.f32 %v648, %v522
    %v650 = vadd.f32 %v649, %v523
    %v651 = vadd.f32 %v650, %v524
    %v652 = vadd.f32 %v651, %v525
    %v653 = vadd.f32 %v652, %v526
    %v654 = vadd.f32 %v653, %v527
    %v655 = vadd.f32 %v654, %v528
    %v656 = vadd.f32 %v655, %v529
    %v657 = vadd.f32 %v656, %v530
    %v658 = vadd.f32 %v657, %v531
    %v659 = vadd.f32 %v658, %v532
    %v660 = vadd.f32 %v659, %v533
    %v661 = vadd.f32 %v660, %v534
    %v662 = vadd.f32 %v661, %v535
    %v663 = vadd.f32 %v662, %v536
    %v664 = vadd.f32 %v663, %v537
    %v665 = vadd.f32 %v664, %v538
    %v666 = vadd.f32 %v665, %v539
    %v667 = vadd.f32 %v666, %v540
    %v668 = vadd.f32 %v667, %v541
    %v669 = vadd.f32 %v668, %v542
    %v670 = vadd.f32 %v669, %v543
    %v671 = vadd.f32 %v670, %v544
    %v672 = vadd.f32 %v671, %v545
    %v673 = vadd.f32 %v672, %v546
    %v674 = vadd.f32 %v673, %v547
    %v675 = vadd.f32 %v674, %v548
    %v676 = vadd.f32 %v675, %v549
    %v677 = vadd.f32 %v676, %v550
    %v678 = vadd.f32 %v677, %v551
    %v679 = vrot.slane %v678, 4
    %v680 = vadd.f32 %v678, %v679
    %v681 = vrot.slane %v680, 2
    %v682 = vadd.f32 %v680, %v681
    %v683 = vrot.slane %v682, 1
    %v684 = vadd.f32 %v682, %v683
    %685 = vst [vmem:[#allocation7] sm:$0x1] %v684
    // Predicated region
    $region18: #{tpu_custom_call.1} parent=1 // pred_check
      _
    $region19: #{tpu_custom_call.1} parent=1 // pred_check_branch
      %687 = sbr.rel (0) target = $region21
    $region20: #{tpu_custom_call.1} parent=1 // pred_region
      %s689 = ssub.s32 16, 16
      %690 = vsyncadd [#allocation4], %s689
      %s692 = sshll.u32 [#allocation7], 4
      %s693 = int_to_ptr.vmem [resolvable:$true] %s692
      %695 = dma.vmem_to_hbm [thread:$0]  %s693, 16, %s2, [#allocation4]
    $region21: #{tpu_custom_call.1} parent=1 // pred_fallthru
      _
    // Predicated region
    $region22: #{tpu_custom_call.1} parent=1 // pred_check
      _
    $region23: #{tpu_custom_call.1} parent=1 // pred_check_branch
      %697 = sbr.rel (0) target = $region25
    $region24: #{tpu_custom_call.1} parent=1 // pred_region
      %698 = dma.done [#allocation4], 16
    $region25: #{tpu_custom_call.1} parent=1 // pred_fallthru
      _
    %699 = vsyncpa [#allocation3], 1
    %700 = vsyncpa [#allocation6], 1
    %701 = vsyncpa [#allocation4], 1

</llo_original>
